<compile_context>
chip_gen: v7x
topology: tpu7x:2x2x1
jax: 0.10.0
libtpu: 0.0.40
codegen_flags: <defaults>
</compile_context>

<pallas_src>
import functools

import jax
import jax.numpy as jnp
from jax.experimental import pallas as pl
from jax.experimental.pallas import tpu as pltpu

ALPHA = 0.25
GAMMA = 2              # Python int -> (1-pt)**2 lowers to a single VPU multiply
LANES = 128            # vreg lane width
SUBLANES = 8           # vreg sublane count (f32)
MAX_TILE_ROWS = 2048   # (2048,128) f32 = 1 MiB/buffer; 2 inputs x 2 pipeline
                       # buffers = 4 MiB, far under the 32 MiB VMEM limit below
PAD_X = 60.0           # padded logit; with target 1 the focal loss is ~exp(-60)~0
PAD_T = 1.0


def _round_up(a, b):
    return pl.cdiv(a, b) * b


def _focal_loss_kernel(x_ref, t_ref, out_ref, *, alpha, gamma, rows, tile_rows):
    i = pl.program_id(0)

    def compute(mask_tail_rows):
        x = x_ref[...].astype(jnp.float32)
        t = t_ref[...].astype(jnp.float32)

        # Stable binary_cross_entropy_with_logits, reduction='none':
        #   bce = max(x, 0) - x*t + log1p(exp(-|x|))
        ax = jnp.abs(x)
        e = jnp.exp(-ax)                       # EUP, reused below
        bce = jnp.maximum(x, 0.0) - x * t + jnp.log1p(e)

        # sigmoid(x) from the already-computed exp(-|x|).
        # (pl.reciprocal(1+e, approx=True) is a cheaper EUP-only option, but its
        #  ~2^-12 relative error leaks into (1-pt)**gamma; keep the exact divide.)
        s = 1.0 / (1.0 + e)                    # sigmoid(|x|)
        p = jnp.where(x >= 0.0, s, 1.0 - s)    # == sigmoid(x)

        # 1 - pt, with pt = p*t + (1-p)*(1-t), folded to 4 VPU ops.
        one_minus_pt = (p + t) - 2.0 * (p * t)
        f = one_minus_pt ** gamma * bce

        if alpha >= 0:  # static Python branch (matches torch `if self.alpha >= 0`)
            # alpha*t + (1-alpha)*(1-t) == (1-alpha) + (2*alpha-1)*t
            f = ((1.0 - alpha) + (2.0 * alpha - 1.0) * t) * f

        if mask_tail_rows:
            # Ragged boundary block only: rows past the end of the row-padded
            # input hold uninitialized VMEM; a select keeps garbage/NaN out of
            # the partial sum.  (int32 row math: fine for n < 2**31 * 128.)
            row = jax.lax.broadcasted_iota(jnp.int32, f.shape, 0)
            f = jnp.where(row < rows - i * tile_rows, f, 0.0)

        # Fold (tile_rows, 128) -> (8, 128) in-registers (pure VPU adds); the
        # final cross-lane reduction happens on a tiny array in the wrapper.
        out_ref[...] = f.reshape(tile_rows // SUBLANES, SUBLANES, LANES).sum(axis=0)

    if rows % tile_rows == 0:
        compute(False)                         # no boundary block exists
    else:
        last = pl.num_programs(0) - 1

        @pl.when(i != last)
        def _full_blocks():
            compute(False)

        @pl.when(i == last)
        def _ragged_block():
            compute(True)


def focal_loss(inputs, targets, alpha=ALPHA, gamma=GAMMA,
               max_tile_rows=MAX_TILE_ROWS):
    """Mean binary focal loss over all elements (== torch FocalLoss.forward)."""
    assert inputs.shape == targets.shape
    assert max_tile_rows % SUBLANES == 0 and max_tile_rows > 0
    n = inputs.size

    x = inputs.reshape(-1)
    t = targets.reshape(-1)

    # Pad only up to the next (8, 128) slab, with values whose focal loss is ~0
    # (logit +60, target 1), so no per-element validity mask is ever needed.
    chunk = SUBLANES * LANES
    padded = _round_up(n, chunk)
    if padded != n:
        x = jnp.pad(x, (0, padded - n), constant_values=PAD_X)
        t = jnp.pad(t, (0, padded - n), constant_values=PAD_T)

    rows = padded // LANES                     # multiple of 8
    tile_rows = min(max_tile_rows, rows)       # multiple of 8, <= rows
    blocks = pl.cdiv(rows, tile_rows)

    x = x.reshape(rows, LANES)
    t = t.reshape(rows, LANES)

    kernel = functools.partial(
        _focal_loss_kernel, alpha=alpha, gamma=gamma,
        rows=rows, tile_rows=tile_rows)

    in_spec = pl.BlockSpec((tile_rows, LANES), lambda i: (i, 0))

    partials = pl.pallas_call(
        kernel,
        out_shape=jax.ShapeDtypeStruct((blocks * SUBLANES, LANES), jnp.float32),
        grid=(blocks,),
        in_specs=[in_spec, in_spec],
        out_specs=pl.BlockSpec((SUBLANES, LANES), lambda i: (i, 0)),
        compiler_params=pltpu.CompilerParams(
            # Each step writes its own output block -> axis is truly parallel;
            # on v7x the runtime can shard blocks across both TensorCores.
            # TODO(synk): if xprof shows an idle v7x core, switch this axis to
            # pltpu.CORE_PARALLEL.
            dimension_semantics=("parallel",),
            vmem_limit_bytes=32 * 1024 * 1024),
    )(x, t)

    # Tiny final reduction, then mean over the ORIGINAL element count.
    return jnp.sum(partials) / n


def _focal_loss_ref(inputs, targets, alpha=ALPHA, gamma=GAMMA):
    x = inputs.astype(jnp.float32)
    t = targets.astype(jnp.float32)
    bce = jnp.maximum(x, 0.0) - x * t + jnp.log1p(jnp.exp(-jnp.abs(x)))
    p = jax.nn.sigmoid(x)
    pt = p * t + (1.0 - p) * (1.0 - t)
    f = (1.0 - pt) ** gamma * bce
    if alpha >= 0:
        alpha_t = alpha * t + (1.0 - alpha) * (1.0 - t)
        f = alpha_t * f
    return jnp.mean(f)


if __name__ == "__main__":
    key = jax.random.PRNGKey(0)
    k1, k2, k3, k4 = jax.random.split(key, 4)

    # NCHW logits + binary targets (small shapes).
    B, C, H, W = 2, 4, 16, 16
    inputs = jax.random.normal(k1, (B, C, H, W), dtype=jnp.float32)
    targets = (jax.random.uniform(k2, (B, C, H, W)) > 0.5).astype(jnp.float32)

    loss = jax.block_until_ready(focal_loss(inputs, targets))
    ref = _focal_loss_ref(inputs, targets)
    assert jnp.allclose(loss, ref, rtol=1e-5, atol=1e-5), (loss, ref)

    # Non-aligned shape + small max_tile_rows to exercise the padding path and
    # the pl.when-gated ragged boundary block.
    small_in = jax.random.normal(k3, (3, 5, 37, 41), dtype=jnp.float32)
    small_tg = (jax.random.uniform(k4, (3, 5, 37, 41)) > 0.5).astype(jnp.float32)
    loss2 = jax.block_until_ready(
        focal_loss(small_in, small_tg, max_tile_rows=16))
    ref2 = _focal_loss_ref(small_in, small_tg)
    assert jnp.allclose(loss2, ref2, rtol=1e-5, atol=1e-5), (loss2, ref2)

    print("KERNEL_OK")
</pallas_src>

<mosaic_0001>
module attributes {stable_mosaic.version = 11 : i64} {
  func.func @_focal_loss_kernel(%arg0: i32, %arg1: memref<16x128xf32, #tpu.memory_space<vmem>>, %arg2: memref<16x128xf32, #tpu.memory_space<vmem>>, %arg3: memref<8x128xf32, #tpu.memory_space<vmem>>) attributes {dimension_semantics = [#tpu.dimension_semantics<parallel>], iteration_bounds = array<i64: 1>, scalar_prefetch = 0 : i64, scratch_operands = 0 : i64, tpu.core_type = #tpu.core_type<tc>, window_params = [{transform_indices = @transform_0, window_bounds = array<i64: 16, 128>}, {transform_indices = @transform_1, window_bounds = array<i64: 16, 128>}, {transform_indices = @transform_2, window_bounds = array<i64: 8, 128>}]} {
    %c0 = arith.constant 0 : index
    %c0_0 = arith.constant 0 : index
    %0 = vector.load %arg1[%c0, %c0_0] : memref<16x128xf32, #tpu.memory_space<vmem>>, vector<16x128xf32>
    %c0_1 = arith.constant 0 : index
    %c0_2 = arith.constant 0 : index
    %1 = vector.load %arg2[%c0_1, %c0_2] : memref<16x128xf32, #tpu.memory_space<vmem>>, vector<16x128xf32>
    %2 = math.absf %0 : vector<16x128xf32>
    %cst = arith.constant 0.000000e+00 : f32
    %3 = vector.broadcast %cst : f32 to vector<16x128xf32>
    %4 = arith.subf %3, %2 : vector<16x128xf32>
    %5 = math.exp %4 : vector<16x128xf32>
    %cst_3 = arith.constant 0.000000e+00 : f32
    %6 = vector.broadcast %cst_3 : f32 to vector<16x128xf32>
    %7 = arith.maximumf %0, %6 : vector<16x128xf32>
    %8 = arith.mulf %0, %1 : vector<16x128xf32>
    %9 = arith.subf %7, %8 : vector<16x128xf32>
    %10 = math.log1p %5 : vector<16x128xf32>
    %11 = arith.addf %9, %10 : vector<16x128xf32>
    %cst_4 = arith.constant 1.000000e+00 : f32
    %12 = vector.broadcast %cst_4 : f32 to vector<16x128xf32>
    %13 = arith.addf %12, %5 : vector<16x128xf32>
    %cst_5 = arith.constant 1.000000e+00 : f32
    %14 = vector.broadcast %cst_5 : f32 to vector<16x128xf32>
    %15 = arith.divf %14, %13 : vector<16x128xf32>
    %cst_6 = arith.constant 0.000000e+00 : f32
    %16 = vector.broadcast %cst_6 : f32 to vector<16x128xf32>
    %17 = arith.cmpf oge, %0, %16 : vector<16x128xf32>
    %cst_7 = arith.constant 1.000000e+00 : f32
    %18 = vector.broadcast %cst_7 : f32 to vector<16x128xf32>
    %19 = arith.subf %18, %15 : vector<16x128xf32>
    %20 = arith.select %17, %15, %19 : vector<16x128xi1>, vector<16x128xf32>
    %21 = arith.addf %20, %1 : vector<16x128xf32>
    %22 = arith.mulf %20, %1 : vector<16x128xf32>
    %cst_8 = arith.constant 2.000000e+00 : f32
    %23 = vector.broadcast %cst_8 : f32 to vector<16x128xf32>
    %24 = arith.mulf %23, %22 : vector<16x128xf32>
    %25 = arith.subf %21, %24 : vector<16x128xf32>
    %26 = arith.mulf %25, %25 : vector<16x128xf32>
    %27 = arith.mulf %26, %11 : vector<16x128xf32>
    %cst_9 = arith.constant -5.000000e-01 : f32
    %28 = vector.broadcast %cst_9 : f32 to vector<16x128xf32>
    %29 = arith.mulf %28, %1 : vector<16x128xf32>
    %cst_10 = arith.constant 7.500000e-01 : f32
    %30 = vector.broadcast %cst_10 : f32 to vector<16x128xf32>
    %31 = arith.addf %30, %29 : vector<16x128xf32>
    %32 = arith.mulf %31, %27 : vector<16x128xf32>
    %33 = vector.shape_cast %32 : vector<16x128xf32> to vector<2x8x128xf32>
    %cst_11 = arith.constant dense<0.000000e+00> : vector<8x128xf32>
    %34 = vector.multi_reduction <add>, %33, %cst_11 [0] : vector<2x8x128xf32> to vector<8x128xf32>
    %c0_12 = arith.constant 0 : index
    %c0_13 = arith.constant 0 : index
    %35 = vector.load %arg3[%c0_12, %c0_13] : memref<8x128xf32, #tpu.memory_space<vmem>>, vector<8x128xf32>
    tpu.vector_store %arg3[%c0_12, %c0_13], %34 {strides = array<i32>} : memref<8x128xf32, #tpu.memory_space<vmem>>, vector<8x128xf32>,
    return
  }
  func.func @transform_0(%arg0: i32) -> (i32, i32) {
    %c0_i32 = arith.constant 0 : i32
    %c0_i32_0 = arith.constant 0 : i32
    return %arg0, %c0_i32 : i32, i32
  }
  func.func @transform_1(%arg0: i32) -> (i32, i32) {
    %c0_i32 = arith.constant 0 : i32
    %c0_i32_0 = arith.constant 0 : i32
    return %arg0, %c0_i32 : i32, i32
  }
  func.func @transform_2(%arg0: i32) -> (i32, i32) {
    %c0_i32 = arith.constant 0 : i32
    %c0_i32_0 = arith.constant 0 : i32
    return %arg0, %c0_i32 : i32, i32
  }
}

</mosaic_0001>

<llo_original>
// kernel: tpu_custom_call.1
$region0: #{tpu_custom_call.1}
  #allocation0 [shape = 'u32[]', space=smem, size = 0x4, offset = 0x4, fixed_abs, tag = 'smem constant byte address 0x4 - core index']
  #allocation1 [shape = 'u32[144,128]{1,0:T(1,128)}', space=vmem, size = 0x12000, scoped, tag = 'internal scratch']
  %s0 = inlined_call_operand.hbm [shape: f32[16,128], index: 0, kind: input, shape index: {}]
  %s1 = inlined_call_operand.hbm [shape: f32[16,128], index: 1, kind: input, shape index: {}]
  %s2 = inlined_call_operand.hbm [shape: f32[8,128], index: 2, kind: output, shape index: {}]
  %s3 = sld [smem:[#allocation0]]
  $region26: #{tpu_custom_call.1} parent=0
    _
  %s5 = ssub.s32 1, %s3
  %s6 = scalar_select 0, %s5, %s3
  $region1: #{tpu_custom_call.1} parent=0
    #allocation2 [shape = 'u8[8192]{0}', space=vmem, size = 0x2000, scoped, tag = 'input window, operand 0, single buffered']
    #allocation3 [shape = 's32[1]{0}', space=sflag, size = 0x4, scoped, tag = 'scoped memory for tpu_custom_call.1']
    #allocation4 [shape = 's32[1]{0}', space=sflag, size = 0x4, scoped, tag = 'scoped memory for tpu_custom_call.1']
    #allocation5 [shape = 'u8[8192]{0}', space=vmem, size = 0x2000, scoped, tag = 'input window, operand 1, single buffered']
    #allocation6 [shape = 's32[1]{0}', space=sflag, size = 0x4, scoped, tag = 'scoped memory for tpu_custom_call.1']
    #allocation7 [shape = 'u8[4096]{0}', space=vmem, size = 0x1000, scoped, tag = 'output window, operand 0, single buffered']
    %7 = vsyncpa [#allocation3], 0
    %8 = vsyncpa [#allocation6], 0
    %9 = vsyncpa [#allocation4], 0
    // Predicated region
    $region2: #{tpu_custom_call.1} parent=1 // pred_check
      _
    $region3: #{tpu_custom_call.1} parent=1 // pred_check_branch
      %11 = sbr.rel (0) target = $region5
    $region4: #{tpu_custom_call.1} parent=1 // pred_region
      %s13 = ssub.s32 256, 256
      %14 = vsyncadd [#allocation3], %s13
      %s15 = sshll.u32 [#allocation2], 4
      %s16 = int_to_ptr.vmem [resolvable:$true] %s15
      %21 = dma.hbm_to_vmem [thread:$0]  %s0, 256, %s16, [#allocation3], 128, 128, 8
    $region5: #{tpu_custom_call.1} parent=1 // pred_fallthru
      _
    // Predicated region
    $region6: #{tpu_custom_call.1} parent=1 // pred_check
      _
    $region7: #{tpu_custom_call.1} parent=1 // pred_check_branch
      %23 = sbr.rel (0) target = $region9
    $region8: #{tpu_custom_call.1} parent=1 // pred_region
      %s25 = ssub.s32 256, 256
      %26 = vsyncadd [#allocation6], %s25
      %s27 = sshll.u32 [#allocation5], 4
      %s28 = int_to_ptr.vmem [resolvable:$true] %s27
      %33 = dma.hbm_to_vmem [thread:$0]  %s1, 256, %s28, [#allocation6], 128, 128, 8
    $region9: #{tpu_custom_call.1} parent=1 // pred_fallthru
      _
    // Predicated region
    $region10: #{tpu_custom_call.1} parent=1 // pred_check
      _
    $region11: #{tpu_custom_call.1} parent=1 // pred_check_branch
      %35 = sbr.rel (0) target = $region13
    $region12: #{tpu_custom_call.1} parent=1 // pred_region
      %36 = dma.done [#allocation3], 256
    $region13: #{tpu_custom_call.1} parent=1 // pred_fallthru
      _
    // Predicated region
    $region14: #{tpu_custom_call.1} parent=1 // pred_check
      _
    $region15: #{tpu_custom_call.1} parent=1 // pred_check_branch
      %38 = sbr.rel (0) target = $region17
    $region16: #{tpu_custom_call.1} parent=1 // pred_region
      %39 = dma.done [#allocation6], 256
    $region17: #{tpu_custom_call.1} parent=1 // pred_fallthru
      _
    %v40 = vld [vmem:[#allocation2] sm:$0xff]
    %v41 = vld [vmem:[#allocation2 + $0x8] sm:$0xff]
    %v42 = vld [vmem:[#allocation5] sm:$0xff]
    %v43 = vld [vmem:[#allocation5 + $0x8] sm:$0xff]
    %v44 = vand.u32 2147483647, %v40
    %v45 = vand.u32 2147483647, %v41
    %v46 = vsub.f32 0.0, %v44
    %v47 = vsub.f32 0.0, %v45
    %v48 = vmul.f32 %v46, 1.442695
    %v49 = vpow.pop %v48
    %v50 = vmul.f32 %v47, 1.442695
    %v51 = vpow.pop %v50
    %v52 = vmax.f32 %v40, 0.0
    %v53 = vmax.f32 %v41, 0.0
    %v54 = vmul.f32 %v40, %v42
    %v55 = vmul.f32 %v41, %v43
    %v56 = vsub.f32 %v52, %v54
    %v57 = vsub.f32 %v53, %v55
    %v58 = vadd.f32 %v49, 1.0
    %v59 = vlog2.pop %v58
    %v60 = vmul.f32 %v59, 0.6931472
    %v61 = vmul.f32 -0.5, %v49
    %v62 = vadd.f32 %v61, 1.0
    %v63 = vmul.f32 %v62, %v49
    %v64 = vand.u32 2147483647, %v49
    %vm65 = vcmp.lt.f32.partialorder %v64, 0.0004427343
    %v66 = vsel %vm65, %v63, %v60
    %v67 = vadd.f32 %v51, 1.0
    %v68 = vlog2.pop %v67
    %v69 = vmul.f32 %v68, 0.6931472
    %v70 = vmul.f32 -0.5, %v51
    %v71 = vadd.f32 %v70, 1.0
    %v72 = vmul.f32 %v71, %v51
    %v73 = vand.u32 2147483647, %v51
    %vm74 = vcmp.lt.f32.partialorder %v73, 0.0004427343
    %v75 = vsel %vm74, %v72, %v69
    %v76 = vadd.f32 %v56, %v66
    %v77 = vadd.f32 %v57, %v75
    %v78 = vadd.f32 %v49, 1.0
    %v79 = vadd.f32 %v51, 1.0
    %v80 = vrcp.pop %v78
    %v81 = vmul.f32 1.0, %v80
    %v82 = vrcp.pop %v79
    %v83 = vmul.f32 1.0, %v82
    %vm84 = vcmp.ge.f32.partialorder %v40, 0.0
    %vm85 = vcmp.ge.f32.partialorder %v41, 0.0
    %v86 = vsub.f32 1.0, %v81
    %v87 = vsub.f32 1.0, %v83
    %v88 = vsel %vm84, %v81, %v86
    %v89 = vsel %vm85, %v83, %v87
    %v90 = vadd.f32 %v88, %v42
    %v91 = vadd.f32 %v89, %v43
    %v92 = vmul.f32 %v88, %v42
    %v93 = vmul.f32 %v89, %v43
    %v94 = vmul.f32 %v92, 2.0
    %v95 = vmul.f32 %v93, 2.0
    %v96 = vsub.f32 %v90, %v94
    %v97 = vsub.f32 %v91, %v95
    %v98 = vmul.f32 %v96, %v96
    %v99 = vmul.f32 %v97, %v97
    %v100 = vmul.f32 %v98, %v76
    %v101 = vmul.f32 %v99, %v77
    %v102 = vmul.f32 %v42, -0.5
    %v103 = vmul.f32 %v43, -0.5
    %v104 = vadd.f32 %v102, 0.75
    %v105 = vadd.f32 %v103, 0.75
    %v106 = vmul.f32 %v104, %v100
    %v107 = vmul.f32 %v105, %v101
    %v108 = vadd.f32 %v106, %v107
    %109 = vst [vmem:[#allocation7] sm:$0xff] %v108
    // Predicated region
    $region18: #{tpu_custom_call.1} parent=1 // pred_check
      _
    $region19: #{tpu_custom_call.1} parent=1 // pred_check_branch
      %111 = sbr.rel (0) target = $region21
    $region20: #{tpu_custom_call.1} parent=1 // pred_region
      %s113 = ssub.s32 128, 128
      %114 = vsyncadd [#allocation4], %s113
      %s116 = sshll.u32 [#allocation7], 4
      %s117 = int_to_ptr.vmem [resolvable:$true] %s116
      %119 = dma.vmem_to_hbm [thread:$0]  %s117, 128, %s2, [#allocation4]
    $region21: #{tpu_custom_call.1} parent=1 // pred_fallthru
      _
    // Predicated region
    $region22: #{tpu_custom_call.1} parent=1 // pred_check
      _
    $region23: #{tpu_custom_call.1} parent=1 // pred_check_branch
      %121 = sbr.rel (0) target = $region25
    $region24: #{tpu_custom_call.1} parent=1 // pred_region
      %122 = dma.done [#allocation4], 128
    $region25: #{tpu_custom_call.1} parent=1 // pred_fallthru
      _
    %123 = vsyncpa [#allocation3], 1
    %124 = vsyncpa [#allocation6], 1
    %125 = vsyncpa [#allocation4], 1

</llo_original>
